<compile_context>
chip_gen: v7x
topology: tpu7x:2x2x1
jax: 0.10.0
libtpu: 0.0.40
codegen_flags: <defaults>
</compile_context>

<pallas_src>
import jax
import jax.numpy as jnp
from jax.experimental import pallas as pl
from jax.experimental.pallas import tpu as pltpu


def se_block_kernel(x_ref, w1_ref, w2_ref, ones_ref, o_ref):
    # x_ref/o_ref: (TB, C, L)   w1_ref: (H, C) f32   w2_ref: (C, H) f32
    # ones_ref:    (L, 1) in x.dtype (all ones; mean scaling applied afterwards)
    tb = x_ref.shape[0]
    inv_l = 1.0 / x_ref.shape[-1]

    for i in range(tb):  # TB is small & static -> fully unrolled
        xi = x_ref[i]  # (C, L), native dtype; C on sublanes, L on lanes

        # ---- squeeze on the MXU: (C, L) @ (L, 1) -> (C, 1) column, f32 acc ----
        y = jnp.dot(xi, ones_ref[...], preferred_element_type=jnp.float32) * inv_l

        # ---- excite with torch-shaped weights, all column-vector shapes ----
        h = jnp.dot(w1_ref[...], y, preferred_element_type=jnp.float32)   # (H, 1)
        h = jnp.maximum(h, 0.0)
        g = jnp.dot(w2_ref[...], h, preferred_element_type=jnp.float32)   # (C, 1)
        g = jax.nn.sigmoid(g)

        # ---- scale: native-dtype multiply, gate broadcasts along lanes ----
        o_ref[i] = (xi * g.astype(xi.dtype)).astype(o_ref.dtype)


def _vmem_limit_bytes():
    """Per-generation VMEM budget: ~3/4 of physical, capped at 96 MiB."""
    cap = 64 << 20  # conservative default (v7x per-TensorCore VMEM)
    try:
        info = pltpu.get_tpu_info()
        cap = int(getattr(info, "vmem_capacity_bytes", cap))
    except Exception:
        pass
    return min(int(cap * 3 // 4), 96 << 20)


def _pick_batch_tile(B, C, L, itemsize, vmem_limit):
    """Largest TB with double-buffered in+out blocks in budget and grid >= 2."""
    budget = max(vmem_limit - (4 << 20), vmem_limit // 2)  # headroom for weights

    def fits(tb):
        return 4 * tb * C * L * itemsize <= budget  # 2 bufs x (input + output)

    for tb in (8, 4, 2):
        if B % tb == 0 and B // tb >= 2 and fits(tb):
            return tb
    return 1


def se_block_ref(x, w1, w2):
    """Pure-JAX reference matching the PyTorch forward exactly."""
    y = jnp.mean(x, axis=-1)                 # (B, C)
    y = jnp.maximum(y @ w1.T, 0.0)           # (B, H)
    y = jax.nn.sigmoid(y @ w2.T)             # (B, C)
    return x * y[:, :, None]


def se_block(x, w1, w2, *, min_pallas_bytes=1 << 20):
    """x: (B, C, L); w1: (H, C) [torch fc1.weight]; w2: (C, H) [torch fc2.weight]."""
    B, C, L = x.shape
    H = w1.shape[0]

    # Launch/DMA-latency-bound at tiny sizes: let XLA fuse it instead.
    if x.size * x.dtype.itemsize < min_pallas_bytes:
        return se_block_ref(x, w1, w2)

    vmem_limit = _vmem_limit_bytes()
    tb = _pick_batch_tile(B, C, L, x.dtype.itemsize, vmem_limit)

    w1_f = jnp.asarray(w1, jnp.float32)          # (H, C), torch layout, resident
    w2_f = jnp.asarray(w2, jnp.float32)          # (C, H), torch layout, resident
    ones_col = jnp.ones((L, 1), dtype=x.dtype)   # squeeze vector (MXU reduce)

    return pl.pallas_call(
        se_block_kernel,
        out_shape=jax.ShapeDtypeStruct((B, C, L), x.dtype),
        grid_spec=pltpu.PrefetchScalarGridSpec(
            num_scalar_prefetch=0,
            grid=(B // tb,),
            in_specs=[
                pl.BlockSpec((tb, C, L), lambda b: (b, 0, 0)),  # x tile (streamed)
                pl.BlockSpec((H, C), lambda b: (0, 0)),         # fc1.weight (resident)
                pl.BlockSpec((C, H), lambda b: (0, 0)),         # fc2.weight (resident)
                pl.BlockSpec((L, 1), lambda b: (0, 0)),         # ones column (resident)
            ],
            out_specs=pl.BlockSpec((tb, C, L), lambda b: (b, 0, 0)),
        ),
        compiler_params=pltpu.CompilerParams(
            # Batch tiles are independent -> megacore sharding on v7x.
            dimension_semantics=("parallel",),
            vmem_limit_bytes=vmem_limit,
        ),
    )(x, w1_f, w2_f, ones_col)


if __name__ == "__main__":
    # Shapes consistent with SEBlock(channel=64, reduction=16) on (B, C, L) input.
    B, C, L = 2, 64, 128
    reduction = 16
    H = C // reduction  # 4

    key = jax.random.PRNGKey(0)
    kx, k1, k2 = jax.random.split(key, 3)

    x = jax.random.normal(kx, (B, C, L), dtype=jnp.float32)
    # PyTorch Linear weight shapes: fc1.weight (H, C), fc2.weight (C, H).
    w1 = jax.random.normal(k1, (H, C), dtype=jnp.float32) * (1.0 / jnp.sqrt(C))
    w2 = jax.random.normal(k2, (C, H), dtype=jnp.float32) * (1.0 / jnp.sqrt(H))

    # Force the Pallas path (demo is only 64 KiB, below the default fallback cut).
    out = se_block(x, w1, w2, min_pallas_bytes=0)
    out = jax.block_until_ready(out)

    ref = se_block_ref(x, w1, w2)
    assert out.shape == (B, C, L)
    assert jnp.allclose(out, ref, atol=1e-5, rtol=1e-5), "mismatch vs reference"

    print("KERNEL_OK")
</pallas_src>

<mosaic_0001>
module attributes {stable_mosaic.version = 11 : i64} {
  func.func @se_block_kernel(%arg0: i32, %arg1: memref<1x64x128xf32, #tpu.memory_space<vmem>>, %arg2: memref<4x64xf32, #tpu.memory_space<vmem>>, %arg3: memref<64x4xf32, #tpu.memory_space<vmem>>, %arg4: memref<128x1xf32, #tpu.memory_space<vmem>>, %arg5: memref<1x64x128xf32, #tpu.memory_space<vmem>>) attributes {dimension_semantics = [#tpu.dimension_semantics<parallel>], iteration_bounds = array<i64: 2>, scalar_prefetch = 0 : i64, scratch_operands = 0 : i64, tpu.core_type = #tpu.core_type<tc>, window_params = [{transform_indices = @transform_0, window_bounds = array<i64: 1, 64, 128>}, {pipeline_mode = #tpu.pipeline_mode<synchronous>, transform_indices = @transform_1, window_bounds = array<i64: 4, 64>}, {pipeline_mode = #tpu.pipeline_mode<synchronous>, transform_indices = @transform_2, window_bounds = array<i64: 64, 4>}, {pipeline_mode = #tpu.pipeline_mode<synchronous>, transform_indices = @transform_3, window_bounds = array<i64: 128, 1>}, {transform_indices = @transform_4, window_bounds = array<i64: 1, 64, 128>}]} {
    %c0 = arith.constant 0 : index
    %c0_0 = arith.constant 0 : index
    %c0_1 = arith.constant 0 : index
    %0 = vector.load %arg1[%c0, %c0_0, %c0_1] : memref<1x64x128xf32, #tpu.memory_space<vmem>>, vector<1x64x128xf32>
    %1 = vector.shape_cast %0 : vector<1x64x128xf32> to vector<64x128xf32>
    %c0_2 = arith.constant 0 : index
    %c0_3 = arith.constant 0 : index
    %2 = vector.load %arg4[%c0_2, %c0_3] : memref<128x1xf32, #tpu.memory_space<vmem>>, vector<128x1xf32>
    %cst = arith.constant dense<0.000000e+00> : vector<64x1xf32>
    %3 = tpu.matmul %1, %2, %cst {dimension_numbers = #tpu.dot_dimension_numbers<[1], [0], [0], [1], [0, 0, 1, 1], [], []>} : vector<64x128xf32>, vector<128x1xf32>, vector<64x1xf32> -> vector<64x1xf32>
    %cst_4 = arith.constant 7.812500e-03 : f32
    %4 = vector.broadcast %cst_4 : f32 to vector<64x1xf32>
    %5 = arith.mulf %3, %4 : vector<64x1xf32>
    %c0_5 = arith.constant 0 : index
    %c0_6 = arith.constant 0 : index
    %6 = vector.load %arg2[%c0_5, %c0_6] : memref<4x64xf32, #tpu.memory_space<vmem>>, vector<4x64xf32>
    %cst_7 = arith.constant dense<0.000000e+00> : vector<4x1xf32>
    %7 = tpu.matmul %6, %5, %cst_7 {dimension_numbers = #tpu.dot_dimension_numbers<[1], [0], [0], [1], [0, 0, 1, 1], [], []>} : vector<4x64xf32>, vector<64x1xf32>, vector<4x1xf32> -> vector<4x1xf32>
    %cst_8 = arith.constant 0.000000e+00 : f32
    %8 = vector.broadcast %cst_8 : f32 to vector<4x1xf32>
    %9 = arith.maximumf %7, %8 : vector<4x1xf32>
    %c0_9 = arith.constant 0 : index
    %c0_10 = arith.constant 0 : index
    %10 = vector.load %arg3[%c0_9, %c0_10] : memref<64x4xf32, #tpu.memory_space<vmem>>, vector<64x4xf32>
    %cst_11 = arith.constant dense<0.000000e+00> : vector<64x1xf32>
    %11 = tpu.matmul %10, %9, %cst_11 {dimension_numbers = #tpu.dot_dimension_numbers<[1], [0], [0], [1], [0, 0, 1, 1], [], []>} : vector<64x4xf32>, vector<4x1xf32>, vector<64x1xf32> -> vector<64x1xf32>
    %12 = arith.negf %11 : vector<64x1xf32>
    %13 = math.exp %12 : vector<64x1xf32>
    %cst_12 = arith.constant 1.000000e+00 : f32
    %14 = vector.broadcast %cst_12 : f32 to vector<64x1xf32>
    %15 = arith.addf %14, %13 : vector<64x1xf32>
    %16 = arith.divf %14, %15 : vector<64x1xf32>
    %17 = vector.broadcast %16 : vector<64x1xf32> to vector<64x128xf32>
    %18 = arith.mulf %1, %17 : vector<64x128xf32>
    %c0_13 = arith.constant 0 : index
    %c0_14 = arith.constant 0 : index
    %c0_15 = arith.constant 0 : index
    %19 = vector.load %arg5[%c0_13, %c0_14, %c0_15] : memref<1x64x128xf32, #tpu.memory_space<vmem>>, vector<1x64x128xf32>
    %20 = vector.shape_cast %19 : vector<1x64x128xf32> to vector<64x128xf32>
    %21 = vector.shape_cast %18 : vector<64x128xf32> to vector<1x64x128xf32>
    tpu.vector_store %arg5[%c0_13, %c0_14, %c0_15], %21 {strides = array<i32>} : memref<1x64x128xf32, #tpu.memory_space<vmem>>, vector<1x64x128xf32>,
    return
  }
  func.func @transform_0(%arg0: i32) -> (i32, i32, i32) {
    %c0_i32 = arith.constant 0 : i32
    %c0_i32_0 = arith.constant 0 : i32
    %c0_i32_1 = arith.constant 0 : i32
    return %arg0, %c0_i32, %c0_i32_0 : i32, i32, i32
  }
  func.func @transform_1(%arg0: i32) -> (i32, i32) {
    %c0_i32 = arith.constant 0 : i32
    %c0_i32_0 = arith.constant 0 : i32
    %c0_i32_1 = arith.constant 0 : i32
    return %c0_i32, %c0_i32_0 : i32, i32
  }
  func.func @transform_2(%arg0: i32) -> (i32, i32) {
    %c0_i32 = arith.constant 0 : i32
    %c0_i32_0 = arith.constant 0 : i32
    %c0_i32_1 = arith.constant 0 : i32
    return %c0_i32, %c0_i32_0 : i32, i32
  }
  func.func @transform_3(%arg0: i32) -> (i32, i32) {
    %c0_i32 = arith.constant 0 : i32
    %c0_i32_0 = arith.constant 0 : i32
    %c0_i32_1 = arith.constant 0 : i32
    return %c0_i32, %c0_i32_0 : i32, i32
  }
  func.func @transform_4(%arg0: i32) -> (i32, i32, i32) {
    %c0_i32 = arith.constant 0 : i32
    %c0_i32_0 = arith.constant 0 : i32
    %c0_i32_1 = arith.constant 0 : i32
    return %arg0, %c0_i32, %c0_i32_0 : i32, i32, i32
  }
}

</mosaic_0001>

<llo_original>
// kernel: tpu_custom_call.1
$region0: #{tpu_custom_call.1}
  #allocation0 [shape = 'u32[]', space=smem, size = 0x4, offset = 0x4, fixed_abs, tag = 'smem constant byte address 0x4 - core index']
  #allocation1 [shape = 'u32[144,128]{1,0:T(1,128)}', space=vmem, size = 0x12000, scoped, tag = 'internal scratch']
  %s0 = inlined_call_operand.vmem [shape: f32[2,64,128], index: 0, kind: input, shape index: {}]
  %s1 = inlined_call_operand.vmem [shape: f32[4,64], index: 1, kind: input, shape index: {}]
  %s2 = inlined_call_operand.vmem [shape: f32[64,4], index: 2, kind: input, shape index: {}]
  %s3 = inlined_call_operand.vmem [shape: f32[128,1], index: 3, kind: input, shape index: {}]
  %s4 = inlined_call_operand.hbm [shape: f32[2,64,128], index: 4, kind: output, shape index: {}]
  %s5 = sld [smem:[#allocation0]]
  $region49: #{tpu_custom_call.1} parent=0
    _
  %s7 = ssub.s32 1, %s5
  %s8 = scalar_select 0, %s7, %s5
  $region1: #{tpu_custom_call.1} parent=0
    #allocation2 [shape = 'u8[65536]{0}', space=vmem, size = 0x10000, scoped, tag = 'output window, operand 0']
    #allocation3 [shape = 's32[2]{0}', space=sflag, size = 0x8, scoped, tag = 'scoped memory for tpu_custom_call.1']
    %9 = vsyncpa [#allocation3], 0
    %s10 = scalar_lea.sflag [#allocation3], 1
    %11 = vsyncpa %s10, 0
    loop: start=0, step=1, limit=4
    $region2: #{tpu_custom_call.1} parent=1 // loop_pre_header
      _
    $region3: #{tpu_custom_call.1} parent=1 // loop_header
      %s13 = sphi 0, %s17
      %p14 = scmp.ge.s32.totalorder %s13, 4
      %s23 = sphi 0, %s25
      %s26 = sphi 0, %s23
      %s27 = sphi 0, %s26
      %s43 = sphi 0, %s27
      %s47 = sphi 0, %s47
      %s49 = sphi 0, %s47
      %s50 = sphi 0, %s49
      %s64 = sphi 0, %s50
      %s68 = sphi 0, %s68
      %s70 = sphi 0, %s68
      %s71 = sphi 0, %s70
      %s85 = sphi 0, %s71
      %s89 = sphi 0, %s89
      %s91 = sphi 0, %s89
      %s92 = sphi 0, %s91
      %s106 = sphi 0, %s92
      %s112 = sphi 0, %s114
      %s115 = sphi 0, %s112
      %s116 = sphi 0, %s115
      %s132 = sphi 0, %s116
    $region4: #{tpu_custom_call.1} parent=1 // loop_header_branch
      %16 = sbr.rel (%p14) target = $region8
    $region5: #{tpu_custom_call.1} parent=1 // loop_body
      %s18 = ssub.s32 %s13, 1
      %s19 = ssub.s32 %s13, 2
      %s20 = sadd.s32 %s13, 1
      %s21 = ssub.s32 %s13, %s20
      %p22 = scmp.eq.s32.totalorder %s21, 0
      %s24 = sadd.s32 %s23, 1
      %s25 = scalar_select %p22, %s23, %s24
      %p28 = pneg %p22
      %p29 = scmp.eq.s32.totalorder %s13, 1
      %p30 = por %p28, %p29
      %p31 = scmp.ne.s32.totalorder %s23, %s26
      %p32 = scmp.eq.s32.totalorder %s13, 0
      %p33 = por %p31, %p32
      %p34 = scmp.ne.s32.totalorder %s23, %s26
      %p35 = scmp.eq.s32.totalorder %s18, 1
      %p36 = por %p34, %p35
      %p37 = scmp.ne.s32.totalorder %s26, %s27
      %p38 = scmp.eq.s32.totalorder %s18, 0
      %p39 = por %p37, %p38
      %p40 = scmp.ne.s32.totalorder %s26, %s27
      %p41 = scmp.eq.s32.totalorder %s19, 1
      %p42 = por %p40, %p41
      %p44 = scmp.ne.s32.totalorder %s27, %s43
      %p45 = scmp.eq.s32.totalorder %s19, 0
      %p46 = por %p44, %p45
      %s48 = sadd.s32 %s47, 1
      %p51 = scmp.eq.s32.totalorder %s13, 1
      %p52 = scmp.ne.s32.totalorder %s47, %s49
      %p53 = scmp.eq.s32.totalorder %s13, 0
      %p54 = por %p52, %p53
      %p55 = scmp.ne.s32.totalorder %s47, %s49
      %p56 = scmp.eq.s32.totalorder %s18, 1
      %p57 = por %p55, %p56
      %p58 = scmp.ne.s32.totalorder %s49, %s50
      %p59 = scmp.eq.s32.totalorder %s18, 0
      %p60 = por %p58, %p59
      %p61 = scmp.ne.s32.totalorder %s49, %s50
      %p62 = scmp.eq.s32.totalorder %s19, 1
      %p63 = por %p61, %p62
      %p65 = scmp.ne.s32.totalorder %s50, %s64
      %p66 = scmp.eq.s32.totalorder %s19, 0
      %p67 = por %p65, %p66
      %s69 = sadd.s32 %s68, 1
      %p72 = scmp.eq.s32.totalorder %s13, 1
      %p73 = scmp.ne.s32.totalorder %s68, %s70
      %p74 = scmp.eq.s32.totalorder %s13, 0
      %p75 = por %p73, %p74
      %p76 = scmp.ne.s32.totalorder %s68, %s70
      %p77 = scmp.eq.s32.totalorder %s18, 1
      %p78 = por %p76, %p77
      %p79 = scmp.ne.s32.totalorder %s70, %s71
      %p80 = scmp.eq.s32.totalorder %s18, 0
      %p81 = por %p79, %p80
      %p82 = scmp.ne.s32.totalorder %s70, %s71
      %p83 = scmp.eq.s32.totalorder %s19, 1
      %p84 = por %p82, %p83
      %p86 = scmp.ne.s32.totalorder %s71, %s85
      %p87 = scmp.eq.s32.totalorder %s19, 0
      %p88 = por %p86, %p87
      %s90 = sadd.s32 %s89, 1
      %p93 = scmp.eq.s32.totalorder %s13, 1
      %p94 = scmp.ne.s32.totalorder %s89, %s91
      %p95 = scmp.eq.s32.totalorder %s13, 0
      %p96 = por %p94, %p95
      %p97 = scmp.ne.s32.totalorder %s89, %s91
      %p98 = scmp.eq.s32.totalorder %s18, 1
      %p99 = por %p97, %p98
      %p100 = scmp.ne.s32.totalorder %s91, %s92
      %p101 = scmp.eq.s32.totalorder %s18, 0
      %p102 = por %p100, %p101
      %p103 = scmp.ne.s32.totalorder %s91, %s92
      %p104 = scmp.eq.s32.totalorder %s19, 1
      %p105 = por %p103, %p104
      %p107 = scmp.ne.s32.totalorder %s92, %s106
      %p108 = scmp.eq.s32.totalorder %s19, 0
      %p109 = por %p107, %p108
      %s110 = ssub.s32 %s13, %s20
      %p111 = scmp.eq.s32.totalorder %s110, 0
      %s113 = sadd.s32 %s112, 1
      %s114 = scalar_select %p111, %s112, %s113
      %p117 = pneg %p111
      %p118 = scmp.eq.s32.totalorder %s13, 1
      %p119 = por %p117, %p118
      %p120 = scmp.ne.s32.totalorder %s112, %s115
      %p121 = scmp.eq.s32.totalorder %s13, 0
      %p122 = por %p120, %p121
      %p123 = scmp.ne.s32.totalorder %s112, %s115
      %p124 = scmp.eq.s32.totalorder %s18, 1
      %p125 = por %p123, %p124
      %p126 = scmp.ne.s32.totalorder %s115, %s116
      %p127 = scmp.eq.s32.totalorder %s18, 0
      %p128 = por %p126, %p127
      %p129 = scmp.ne.s32.totalorder %s115, %s116
      %p130 = scmp.eq.s32.totalorder %s19, 1
      %p131 = por %p129, %p130
      %p133 = scmp.ne.s32.totalorder %s116, %s132
      %p134 = scmp.eq.s32.totalorder %s19, 0
      %p135 = por %p133, %p134
      %p136 = scmp.le.s32.totalorder 1, %s13
      %p137 = scmp.lt.s32.totalorder %s13, 3
      %p138 = pnand %p136, %p137
      %p139 = pneg %p138
      // Predicated region
      $region9: #{tpu_custom_call.1} parent=5 // pred_check
        _
      $region10: #{tpu_custom_call.1} parent=5 // pred_check_branch
        %141 = sbr.rel (%p138) target = $region12
      $region11: #{tpu_custom_call.1} parent=5 // pred_region
        %s142 = ssub.s32 %s13, 1
        // Predicated region
        $region13: #{tpu_custom_call.1} parent=11 // pred_check
          %p143 = pneg %p60
        $region14: #{tpu_custom_call.1} parent=11 // pred_check_branch
          %145 = sbr.rel (%p143) target = $region16
        $region15: #{tpu_custom_call.1} parent=11 // pred_region
          _
        $region16: #{tpu_custom_call.1} parent=11 // pred_fallthru
          _
        // Predicated region
        $region17: #{tpu_custom_call.1} parent=11 // pred_check
          %p146 = pneg %p81
        $region18: #{tpu_custom_call.1} parent=11 // pred_check_branch
          %148 = sbr.rel (%p146) target = $region20
        $region19: #{tpu_custom_call.1} parent=11 // pred_region
          _
        $region20: #{tpu_custom_call.1} parent=11 // pred_fallthru
          _
        // Predicated region
        $region21: #{tpu_custom_call.1} parent=11 // pred_check
          %p149 = pneg %p102
        $region22: #{tpu_custom_call.1} parent=11 // pred_check_branch
          %151 = sbr.rel (%p149) target = $region24
        $region23: #{tpu_custom_call.1} parent=11 // pred_region
          _
        $region24: #{tpu_custom_call.1} parent=11 // pred_fallthru
          _
      $region12: #{tpu_custom_call.1} parent=5 // pred_fallthru
        _
      %p152 = scmp.lt.s32.totalorder %s13, 2
      // Predicated region
      $region25: #{tpu_custom_call.1} parent=5 // pred_check
        %p153 = pneg %p152
      $region26: #{tpu_custom_call.1} parent=5 // pred_check_branch
        %155 = sbr.rel (%p153) target = $region28
      $region27: #{tpu_custom_call.1} parent=5 // pred_region
        // Predicated region
        $region29: #{tpu_custom_call.1} parent=27 // pred_check
          %p156 = pneg %p33
        $region30: #{tpu_custom_call.1} parent=27 // pred_check_branch
          %158 = sbr.rel (%p156) target = $region32
        $region31: #{tpu_custom_call.1} parent=27 // pred_region
          %p159 = scmp.lt.s32.totalorder %s13, 1
          %s160 = scalar_select %p159, %s13, 1
          %s161 = smul.addr %s160, 8
          %s162 = smul.addr %s161, 8
          %s163 = scalar_lea.vmem %s0, %s162
        $region32: #{tpu_custom_call.1} parent=27 // pred_fallthru
          _
      $region28: #{tpu_custom_call.1} parent=5 // pred_fallthru
        _
      %p164 = scmp.le.s32.totalorder 1, %s13
      %p165 = scmp.lt.s32.totalorder %s13, 3
      %p166 = pnand %p164, %p165
      %p167 = pneg %p166
      // Predicated region
      $region33: #{tpu_custom_call.1} parent=5 // pred_check
        _
      $region34: #{tpu_custom_call.1} parent=5 // pred_check_branch
        %169 = sbr.rel (%p166) target = $region36
      $region35: #{tpu_custom_call.1} parent=5 // pred_region
        %s170 = ssub.s32 %s13, 1
        %p171 = scmp.lt.s32.totalorder %s18, 1
        %s172 = scalar_select %p171, %s18, 1
        %s173 = smul.addr %s172, 8
        %s174 = smul.addr %s173, 8
        %s175 = scalar_lea.vmem %s0, %s174
        %p176 = pneg %p39
        %p177 = pneg %p36
        %p178 = pneg %p60
        %p179 = pneg %p57
        %p180 = pneg %p81
        %p181 = pneg %p78
        %p182 = pneg %p102
        %p183 = pneg %p99
        %p184 = pneg %p128
        %p185 = pneg %p125
        %s186 = sand.u32 %s115, 1
        %s187 = scalar_lea.sflag [#allocation3], %s186
        %s188 = sand.u32 %s115, 1
        %s189 = smul.addr %s188, 64
        %s190 = scalar_lea.vmem [#allocation2], %s189
        %p191 = scmp.lt.s32.totalorder %s18, 1
        %s192 = scalar_select %p191, %s18, 1
        %s193 = smul.addr %s192, 8
        %s194 = smul.addr %s193, 8
        %s195 = scalar_lea.vmem %s0, %s194
        %v196 = vld [vmem:[%s195] sm:$0xff]
        %v197 = vld [vmem:[%s195 + $0x8] sm:$0xff]
        %v198 = vld [vmem:[%s195 + $0x10] sm:$0xff]
        %v199 = vld [vmem:[%s195 + $0x18] sm:$0xff]
        %v200 = vld [vmem:[%s195 + $0x20] sm:$0xff]
        %v201 = vld [vmem:[%s195 + $0x28] sm:$0xff]
        %v202 = vld [vmem:[%s195 + $0x30] sm:$0xff]
        %v203 = vld [vmem:[%s195 + $0x38] sm:$0xff]
        %v204 = vld [vmem:[%s3] sm:$0xff]
        %v205 = vld [vmem:[%s3 + $0x8] sm:$0xff]
        %v206 = vld [vmem:[%s3 + $0x10] sm:$0xff]
        %v207 = vld [vmem:[%s3 + $0x18] sm:$0xff]
        %v208 = vld [vmem:[%s3 + $0x20] sm:$0xff]
        %v209 = vld [vmem:[%s3 + $0x28] sm:$0xff]
        %v210 = vld [vmem:[%s3 + $0x30] sm:$0xff]
        %v211 = vld [vmem:[%s3 + $0x38] sm:$0xff]
        %v212 = vld [vmem:[%s3 + $0x40] sm:$0xff]
        %v213 = vld [vmem:[%s3 + $0x48] sm:$0xff]
        %v214 = vld [vmem:[%s3 + $0x50] sm:$0xff]
        %v215 = vld [vmem:[%s3 + $0x58] sm:$0xff]
        %v216 = vld [vmem:[%s3 + $0x60] sm:$0xff]
        %v217 = vld [vmem:[%s3 + $0x68] sm:$0xff]
        %v218 = vld [vmem:[%s3 + $0x70] sm:$0xff]
        %v219 = vld [vmem:[%s3 + $0x78] sm:$0xff]
        %220 = vmatprep.subr.mxu0 0.0
        %221 = vmatpush1.msra.mxu0 %v204
        %222 = vmatprep.subr.mxu0 0.0
        %223 = vmatpush1.msra.mxu0 %v205
        %224 = vmatprep.subr.mxu0 0.0
        %225 = vmatpush1.msra.mxu0 %v206
        %226 = vmatprep.subr.mxu0 0.0
        %227 = vmatpush1.msra.mxu0 %v207
        %228 = vmatprep.subr.mxu0 0.0
        %229 = vmatpush1.msra.mxu0 %v208
        %230 = vmatprep.subr.mxu0 0.0
        %231 = vmatpush1.msra.mxu0 %v209
        %232 = vmatprep.subr.mxu0 0.0
        %233 = vmatpush1.msra.mxu0 %v210
        %234 = vmatprep.subr.mxu0 0.0
        %235 = vmatpush1.msra.mxu0 %v211
        %236 = vmatprep.subr.mxu0 0.0
        %237 = vmatpush1.msra.mxu0 %v212
        %238 = vmatprep.subr.mxu0 0.0
        %239 = vmatpush1.msra.mxu0 %v213
        %240 = vmatprep.subr.mxu0 0.0
        %241 = vmatpush1.msra.mxu0 %v214
        %242 = vmatprep.subr.mxu0 0.0
        %243 = vmatpush1.msra.mxu0 %v215
        %244 = vmatprep.subr.mxu0 0.0
        %245 = vmatpush1.msra.mxu0 %v216
        %246 = vmatprep.subr.mxu0 0.0
        %247 = vmatpush1.msra.mxu0 %v217
        %248 = vmatprep.subr.mxu0 0.0
        %249 = vmatpush1.msra.mxu0 %v218
        %250 = vmatprep.subr.mxu0 0.0
        %251 = vmatpush1.msra.mxu0 %v219
        %252 = vmatprep.subr.mxu0 0.0
        %253 = vmatpush1.msra.mxu0 0.0
        %254 = vmatprep.subr.mxu0 0.0
        %255 = vmatpush1.msra.mxu0 0.0
        %256 = vmatprep.subr.mxu0 0.0
        %257 = vmatpush1.msra.mxu0 0.0
        %258 = vmatprep.subr.mxu0 0.0
        %259 = vmatpush1.msra.mxu0 0.0
        %260 = vmatprep.subr.mxu0 0.0
        %261 = vmatpush1.msra.mxu0 0.0
        %262 = vmatprep.subr.mxu0 0.0
        %263 = vmatpush1.msra.mxu0 0.0
        %264 = vmatprep.subr.mxu0 0.0
        %265 = vmatpush1.msra.mxu0 0.0
        %266 = vmatprep.subr.mxu0 0.0
        %267 = vmatpush1.msra.mxu0 0.0
        %268 = vmatprep.subr.mxu0 0.0
        %269 = vmatpush1.msra.mxu0 0.0
        %270 = vmatprep.subr.mxu0 0.0
        %271 = vmatpush1.msra.mxu0 0.0
        %272 = vmatprep.subr.mxu0 0.0
        %273 = vmatpush1.msra.mxu0 0.0
        %274 = vmatprep.subr.mxu0 0.0
        %275 = vmatpush1.msra.mxu0 0.0
        %276 = vmatprep.subr.mxu0 0.0
        %277 = vmatpush1.msra.mxu0 0.0
        %278 = vmatprep.subr.mxu0 0.0
        %279 = vmatpush1.msra.mxu0 0.0
        %280 = vmatprep.subr.mxu0 0.0
        %281 = vmatpush1.msra.mxu0 0.0
        %282 = vmatprep.subr.mxu0 0.0
        %283 = vmatpush1.msra.mxu0 0.0
        %284 = vmatprep.mubr.f32.mxu0 0.0
        %285 = vmatmul.mubr.f32.gmra.mrb[0].mxu0 %v196
        %v286 = vpop.f32.mrb[0].mxu0
        %v287 = vadd.f32 0.0, %v286
        %v288 = vpop.f32.mrb[0].mxu0
        %289 = vmatprep.mubr.f32.mxu0 0.0
        %290 = vmatmul.mubr.f32.gmra.mrb[0].mxu0 %v197
        %v291 = vpop.f32.mrb[0].mxu0
        %v292 = vadd.f32 0.0, %v291
        %v293 = vpop.f32.mrb[0].mxu0
        %294 = vmatprep.mubr.f32.mxu0 0.0
        %295 = vmatmul.mubr.f32.gmra.mrb[0].mxu0 %v198
        %v296 = vpop.f32.mrb[0].mxu0
        %v297 = vadd.f32 0.0, %v296
        %v298 = vpop.f32.mrb[0].mxu0
        %299 = vmatprep.mubr.f32.mxu0 0.0
        %300 = vmatmul.mubr.f32.gmra.mrb[0].mxu0 %v199
        %v301 = vpop.f32.mrb[0].mxu0
        %v302 = vadd.f32 0.0, %v301
        %v303 = vpop.f32.mrb[0].mxu0
        %304 = vmatprep.mubr.f32.mxu0 0.0
        %305 = vmatmul.mubr.f32.gmra.mrb[0].mxu0 %v200
        %v306 = vpop.f32.mrb[0].mxu0
        %v307 = vadd.f32 0.0, %v306
        %v308 = vpop.f32.mrb[0].mxu0
        %309 = vmatprep.mubr.f32.mxu0 0.0
        %310 = vmatmul.mubr.f32.gmra.mrb[0].mxu0 %v201
        %v311 = vpop.f32.mrb[0].mxu0
        %v312 = vadd.f32 0.0, %v311
        %v313 = vpop.f32.mrb[0].mxu0
        %314 = vmatprep.mubr.f32.mxu0 0.0
        %315 = vmatmul.mubr.f32.gmra.mrb[0].mxu0 %v202
        %v316 = vpop.f32.mrb[0].mxu0
        %v317 = vadd.f32 0.0, %v316
        %v318 = vpop.f32.mrb[0].mxu0
        %319 = vmatprep.mubr.f32.mxu0 0.0
        %320 = vmatmul.mubr.f32.gmra.mrb[0].mxu0 %v203
        %v321 = vpop.f32.mrb[0].mxu0
        %v322 = vadd.f32 0.0, %v321
        %v323 = vpop.f32.mrb[0].mxu0
        %324 = vdwg.mxu0
        %v325 = vmul.f32 %v287, 0.0078125
        %v326 = vmul.f32 %v292, 0.0078125
        %v327 = vmul.f32 %v297, 0.0078125
        %v328 = vmul.f32 %v302, 0.0078125
        %v329 = vmul.f32 %v307, 0.0078125
        %v330 = vmul.f32 %v312, 0.0078125
        %v331 = vmul.f32 %v317, 0.0078125
        %v332 = vmul.f32 %v322, 0.0078125
        %v333 = vld [vmem:[%s1] sm:$0xf]
        %vm334 = vcmask 523264
        %v336 = vsel %vm334, %v333, 0
        %338 = vmatprep.subr.mxu0 0.0
        %339 = vmatpush1.msra.mxu0 %v325
        %340 = vmatprep.subr.mxu0 0.0
        %341 = vmatpush1.msra.mxu0 %v326
        %342 = vmatprep.subr.mxu0 0.0
        %343 = vmatpush1.msra.mxu0 %v327
        %344 = vmatprep.subr.mxu0 0.0
        %345 = vmatpush1.msra.mxu0 %v328
        %346 = vmatprep.subr.mxu0 0.0
        %347 = vmatpush1.msra.mxu0 %v329
        %348 = vmatprep.subr.mxu0 0.0
        %349 = vmatpush1.msra.mxu0 %v330
        %350 = vmatprep.subr.mxu0 0.0
        %351 = vmatpush1.msra.mxu0 %v331
        %352 = vmatprep.subr.mxu0 0.0
        %353 = vmatpush1.msra.mxu0 %v332
        %354 = vmatprep.subr.mxu0 0.0
        %355 = vmatpush1.msra.mxu0 0.0
        %356 = vmatprep.subr.mxu0 0.0
        %357 = vmatpush1.msra.mxu0 0.0
        %358 = vmatprep.subr.mxu0 0.0
        %359 = vmatpush1.msra.mxu0 0.0
        %360 = vmatprep.subr.mxu0 0.0
        %361 = vmatpush1.msra.mxu0 0.0
        %362 = vmatprep.subr.mxu0 0.0
        %363 = vmatpush1.msra.mxu0 0.0
        %364 = vmatprep.subr.mxu0 0.0
        %365 = vmatpush1.msra.mxu0 0.0
        %366 = vmatprep.subr.mxu0 0.0
        %367 = vmatpush1.msra.mxu0 0.0
        %368 = vmatprep.subr.mxu0 0.0
        %369 = vmatpush1.msra.mxu0 0.0
        %370 = vmatprep.subr.mxu0 0.0
        %371 = vmatpush1.msra.mxu0 0.0
        %372 = vmatprep.subr.mxu0 0.0
        %373 = vmatpush1.msra.mxu0 0.0
        %374 = vmatprep.subr.mxu0 0.0
        %375 = vmatpush1.msra.mxu0 0.0
        %376 = vmatprep.subr.mxu0 0.0
        %377 = vmatpush1.msra.mxu0 0.0
        %378 = vmatprep.subr.mxu0 0.0
        %379 = vmatpush1.msra.mxu0 0.0
        %380 = vmatprep.subr.mxu0 0.0
        %381 = vmatpush1.msra.mxu0 0.0
        %382 = vmatprep.subr.mxu0 0.0
        %383 = vmatpush1.msra.mxu0 0.0
        %384 = vmatprep.subr.mxu0 0.0
        %385 = vmatpush1.msra.mxu0 0.0
        %386 = vmatprep.subr.mxu0 0.0
        %387 = vmatpush1.msra.mxu0 0.0
        %388 = vmatprep.subr.mxu0 0.0
        %389 = vmatpush1.msra.mxu0 0.0
        %390 = vmatprep.subr.mxu0 0.0
        %391 = vmatpush1.msra.mxu0 0.0
        %392 = vmatprep.subr.mxu0 0.0
        %393 = vmatpush1.msra.mxu0 0.0
        %394 = vmatprep.subr.mxu0 0.0
        %395 = vmatpush1.msra.mxu0 0.0
        %396 = vmatprep.subr.mxu0 0.0
        %397 = vmatpush1.msra.mxu0 0.0
        %398 = vmatprep.subr.mxu0 0.0
        %399 = vmatpush1.msra.mxu0 0.0
        %400 = vmatprep.subr.mxu0 0.0
        %401 = vmatpush1.msra.mxu0 0.0
        %402 = vmatprep.mubr.f32.mxu0 0.0
        %403 = vmatmul.mubr.f32.gmra.mrb[0].mxu0 %v336
        %v404 = vpop.f32.mrb[0].mxu0
        %v405 = vadd.f32 0.0, %v404
        %v406 = vpop.f32.mrb[0].mxu0
        %407 = vdwg.mxu0
        %v408 = vmax.f32 %v405, 0.0
        %v409 = vld [vmem:[%s2] sm:$0xff]
        %v410 = vld [vmem:[%s2 + $0x8] sm:$0xff]
        %v411 = vld [vmem:[%s2 + $0x10] sm:$0xff]
        %v412 = vld [vmem:[%s2 + $0x18] sm:$0xff]
        %v413 = vld [vmem:[%s2 + $0x20] sm:$0xff]
        %v414 = vld [vmem:[%s2 + $0x28] sm:$0xff]
        %v415 = vld [vmem:[%s2 + $0x30] sm:$0xff]
        %v416 = vld [vmem:[%s2 + $0x38] sm:$0xff]
        %vm417 = vcmask 31744
        %v419 = vsel %vm417, %v409, 0
        %v422 = vsel %vm417, %v410, 0
        %v425 = vsel %vm417, %v411, 0
        %v428 = vsel %vm417, %v412, 0
        %v431 = vsel %vm417, %v413, 0
        %v434 = vsel %vm417, %v414, 0
        %v437 = vsel %vm417, %v415, 0
        %v440 = vsel %vm417, %v416, 0
        %vm442 = vcmask 1043456
        %v444 = vsel %vm442, %v408, 0
        %446 = vmatprep.subr.mxu0 0.0
        %447 = vmatpush1.msra.mxu0 %v444
        %448 = vmatprep.subr.mxu0 0.0
        %449 = vmatpush1.msra.mxu0 0.0
        %450 = vmatprep.subr.mxu0 0.0
        %451 = vmatpush1.msra.mxu0 0.0
        %452 = vmatprep.subr.mxu0 0.0
        %453 = vmatpush1.msra.mxu0 0.0
        %454 = vmatprep.subr.mxu0 0.0
        %455 = vmatpush1.msra.mxu0 0.0
        %456 = vmatprep.subr.mxu0 0.0
        %457 = vmatpush1.msra.mxu0 0.0
        %458 = vmatprep.subr.mxu0 0.0
        %459 = vmatpush1.msra.mxu0 0.0
        %460 = vmatprep.subr.mxu0 0.0
        %461 = vmatpush1.msra.mxu0 0.0
        %462 = vmatprep.subr.mxu0 0.0
        %463 = vmatpush1.msra.mxu0 0.0
        %464 = vmatprep.subr.mxu0 0.0
        %465 = vmatpush1.msra.mxu0 0.0
        %466 = vmatprep.subr.mxu0 0.0
        %467 = vmatpush1.msra.mxu0 0.0
        %468 = vmatprep.subr.mxu0 0.0
        %469 = vmatpush1.msra.mxu0 0.0
        %470 = vmatprep.subr.mxu0 0.0
        %471 = vmatpush1.msra.mxu0 0.0
        %472 = vmatprep.subr.mxu0 0.0
        %473 = vmatpush1.msra.mxu0 0.0
        %474 = vmatprep.subr.mxu0 0.0
        %475 = vmatpush1.msra.mxu0 0.0
        %476 = vmatprep.subr.mxu0 0.0
        %477 = vmatpush1.msra.mxu0 0.0
        %478 = vmatprep.subr.mxu0 0.0
        %479 = vmatpush1.msra.mxu0 0.0
        %480 = vmatprep.subr.mxu0 0.0
        %481 = vmatpush1.msra.mxu0 0.0
        %482 = vmatprep.subr.mxu0 0.0
        %483 = vmatpush1.msra.mxu0 0.0
        %484 = vmatprep.subr.mxu0 0.0
        %485 = vmatpush1.msra.mxu0 0.0
        %486 = vmatprep.subr.mxu0 0.0
        %487 = vmatpush1.msra.mxu0 0.0
        %488 = vmatprep.subr.mxu0 0.0
        %489 = vmatpush1.msra.mxu0 0.0
        %490 = vmatprep.subr.mxu0 0.0
        %491 = vmatpush1.msra.mxu0 0.0
        %492 = vmatprep.subr.mxu0 0.0
        %493 = vmatpush1.msra.mxu0 0.0
        %494 = vmatprep.subr.mxu0 0.0
        %495 = vmatpush1.msra.mxu0 0.0
        %496 = vmatprep.subr.mxu0 0.0
        %497 = vmatpush1.msra.mxu0 0.0
        %498 = vmatprep.subr.mxu0 0.0
        %499 = vmatpush1.msra.mxu0 0.0
        %500 = vmatprep.subr.mxu0 0.0
        %501 = vmatpush1.msra.mxu0 0.0
        %502 = vmatprep.subr.mxu0 0.0
        %503 = vmatpush1.msra.mxu0 0.0
        %504 = vmatprep.subr.mxu0 0.0
        %505 = vmatpush1.msra.mxu0 0.0
        %506 = vmatprep.subr.mxu0 0.0
        %507 = vmatpush1.msra.mxu0 0.0
        %508 = vmatprep.subr.mxu0 0.0
        %509 = vmatpush1.msra.mxu0 0.0
        %510 = vmatprep.mubr.f32.mxu0 0.0
        %511 = vmatmul.mubr.f32.gmra.mrb[0].mxu0 %v419
        %v512 = vpop.f32.mrb[0].mxu0
        %v513 = vadd.f32 0.0, %v512
        %v514 = vpop.f32.mrb[0].mxu0
        %515 = vmatprep.mubr.f32.mxu0 0.0
        %516 = vmatmul.mubr.f32.gmra.mrb[0].mxu0 %v422
        %v517 = vpop.f32.mrb[0].mxu0
        %v518 = vadd.f32 0.0, %v517
        %v519 = vpop.f32.mrb[0].mxu0
        %520 = vmatprep.mubr.f32.mxu0 0.0
        %521 = vmatmul.mubr.f32.gmra.mrb[0].mxu0 %v425
        %v522 = vpop.f32.mrb[0].mxu0
        %v523 = vadd.f32 0.0, %v522
        %v524 = vpop.f32.mrb[0].mxu0
        %525 = vmatprep.mubr.f32.mxu0 0.0
        %526 = vmatmul.mubr.f32.gmra.mrb[0].mxu0 %v428
        %v527 = vpop.f32.mrb[0].mxu0
        %v528 = vadd.f32 0.0, %v527
        %v529 = vpop.f32.mrb[0].mxu0
        %530 = vmatprep.mubr.f32.mxu0 0.0
        %531 = vmatmul.mubr.f32.gmra.mrb[0].mxu0 %v431
        %v532 = vpop.f32.mrb[0].mxu0
        %v533 = vadd.f32 0.0, %v532
        %v534 = vpop.f32.mrb[0].mxu0
        %535 = vmatprep.mubr.f32.mxu0 0.0
        %536 = vmatmul.mubr.f32.gmra.mrb[0].mxu0 %v434
        %v537 = vpop.f32.mrb[0].mxu0
        %v538 = vadd.f32 0.0, %v537
        %v539 = vpop.f32.mrb[0].mxu0
        %540 = vmatprep.mubr.f32.mxu0 0.0
        %541 = vmatmul.mubr.f32.gmra.mrb[0].mxu0 %v437
        %v542 = vpop.f32.mrb[0].mxu0
        %v543 = vadd.f32 0.0, %v542
        %v544 = vpop.f32.mrb[0].mxu0
        %545 = vmatprep.mubr.f32.mxu0 0.0
        %546 = vmatmul.mubr.f32.gmra.mrb[0].mxu0 %v440
        %v547 = vpop.f32.mrb[0].mxu0
        %v548 = vadd.f32 0.0, %v547
        %v549 = vpop.f32.mrb[0].mxu0
        %550 = vdwg.mxu0
        %v551 = vxor.u32 %v513, 2147483648
        %v552 = vxor.u32 %v518, 2147483648
        %v553 = vxor.u32 %v523, 2147483648
        %v554 = vxor.u32 %v528, 2147483648
        %v555 = vxor.u32 %v533, 2147483648
        %v556 = vxor.u32 %v538, 2147483648
        %v557 = vxor.u32 %v543, 2147483648
        %v558 = vxor.u32 %v548, 2147483648
        %v559 = vmul.f32 %v551, 1.442695
        %v560 = vpow.pop %v559
        %v561 = vmul.f32 %v552, 1.442695
        %v562 = vpow.pop %v561
        %v563 = vmul.f32 %v553, 1.442695
        %v564 = vpow.pop %v563
        %v565 = vmul.f32 %v554, 1.442695
        %v566 = vpow.pop %v565
        %v567 = vmul.f32 %v555, 1.442695
        %v568 = vpow.pop %v567
        %v569 = vmul.f32 %v556, 1.442695
        %v570 = vpow.pop %v569
        %v571 = vmul.f32 %v557, 1.442695
        %v572 = vpow.pop %v571
        %v573 = vmul.f32 %v558, 1.442695
        %v574 = vpow.pop %v573
        %v575 = vadd.f32 %v560, 1.0
        %v576 = vadd.f32 %v562, 1.0
        %v577 = vadd.f32 %v564, 1.0
        %v578 = vadd.f32 %v566, 1.0
        %v579 = vadd.f32 %v568, 1.0
        %v580 = vadd.f32 %v570, 1.0
        %v581 = vadd.f32 %v572, 1.0
        %v582 = vadd.f32 %v574, 1.0
        %v583 = vrcp.pop %v575
        %v584 = vmul.f32 1.0, %v583
        %v585 = vrcp.pop %v576
        %v586 = vmul.f32 1.0, %v585
        %v587 = vrcp.pop %v577
        %v588 = vmul.f32 1.0, %v587
        %v589 = vrcp.pop %v578
        %v590 = vmul.f32 1.0, %v589
        %v591 = vrcp.pop %v579
        %v592 = vmul.f32 1.0, %v591
        %v593 = vrcp.pop %v580
        %v594 = vmul.f32 1.0, %v593
        %v595 = vrcp.pop %v581
        %v596 = vmul.f32 1.0, %v595
        %v597 = vrcp.pop %v582
        %v598 = vmul.f32 1.0, %v597
        %600 = vset.pattern.permute.xlu0 0
        %601 = vperm.xlu0 %600, %v584
        %v602 = vpop.permute.xlu0 %601
        %605 = vset.pattern.permute.xlu0 0
        %606 = vperm.xlu0 %605, %v586
        %v607 = vpop.permute.xlu0 %606
        %610 = vset.pattern.permute.xlu0 0
        %611 = vperm.xlu0 %610, %v588
        %v612 = vpop.permute.xlu0 %611
        %615 = vset.pattern.permute.xlu0 0
        %616 = vperm.xlu0 %615, %v590
        %v617 = vpop.permute.xlu0 %616
        %620 = vset.pattern.permute.xlu0 0
        %621 = vperm.xlu0 %620, %v592
        %v622 = vpop.permute.xlu0 %621
        %625 = vset.pattern.permute.xlu0 0
        %626 = vperm.xlu0 %625, %v594
        %v627 = vpop.permute.xlu0 %626
        %630 = vset.pattern.permute.xlu0 0
        %631 = vperm.xlu0 %630, %v596
        %v632 = vpop.permute.xlu0 %631
        %635 = vset.pattern.permute.xlu0 0
        %636 = vperm.xlu0 %635, %v598
        %v637 = vpop.permute.xlu0 %636
        %v639 = vmul.f32 %v196, %v602
        %v640 = vmul.f32 %v197, %v607
        %v641 = vmul.f32 %v198, %v612
        %v642 = vmul.f32 %v199, %v617
        %v643 = vmul.f32 %v200, %v622
        %v644 = vmul.f32 %v201, %v627
        %v645 = vmul.f32 %v202, %v632
        %v646 = vmul.f32 %v203, %v637
        %647 = vst [vmem:[%s190] sm:$0xff] %v639
        %648 = vst [vmem:[%s190 + $0x8] sm:$0xff] %v640
        %649 = vst [vmem:[%s190 + $0x10] sm:$0xff] %v641
        %650 = vst [vmem:[%s190 + $0x18] sm:$0xff] %v642
        %651 = vst [vmem:[%s190 + $0x20] sm:$0xff] %v643
        %652 = vst [vmem:[%s190 + $0x28] sm:$0xff] %v644
        %653 = vst [vmem:[%s190 + $0x30] sm:$0xff] %v645
        %654 = vst [vmem:[%s190 + $0x38] sm:$0xff] %v646
        %s655 = sand.u32 %s115, 1
        %s656 = scalar_lea.sflag [#allocation3], %s655
        %s657 = sand.u32 %s115, 1
        %s658 = smul.addr %s657, 64
        %s659 = scalar_lea.vmem [#allocation2], %s658
        // Predicated region
        $region37: #{tpu_custom_call.1} parent=35 // pred_check
          %p660 = pneg %p125
        $region38: #{tpu_custom_call.1} parent=35 // pred_check_branch
          %662 = sbr.rel (%p660) target = $region40
        $region39: #{tpu_custom_call.1} parent=35 // pred_region
          %s664 = ssub.s32 1024, 1024
          %665 = vsyncadd %s656, %s664
          %s666 = smul.addr %s18, 8
          %s667 = smul.addr %s666, 128
          %s668 = scalar_lea.hbm %s4, %s667
          %s669 = sshll.u32 %s659, 4
          %s670 = int_to_ptr.vmem [resolvable:$true] %s669
          %675 = dma.vmem_to_hbm [thread:$0]  %s670, 1024, %s668, %s656, 128, 128, 8
        $region40: #{tpu_custom_call.1} parent=35 // pred_fallthru
          _
      $region36: #{tpu_custom_call.1} parent=5 // pred_fallthru
        _
      %p676 = scmp.le.s32.totalorder 2, %s13
      // Predicated region
      $region41: #{tpu_custom_call.1} parent=5 // pred_check
        %p677 = pneg %p676
      $region42: #{tpu_custom_call.1} parent=5 // pred_check_branch
        %679 = sbr.rel (%p677) target = $region44
      $region43: #{tpu_custom_call.1} parent=5 // pred_region
        %s680 = ssub.s32 %s13, 2
        // Predicated region
        $region45: #{tpu_custom_call.1} parent=43 // pred_check
          %p681 = pneg %p131
        $region46: #{tpu_custom_call.1} parent=43 // pred_check_branch
          %683 = sbr.rel (%p681) target = $region48
        $region47: #{tpu_custom_call.1} parent=43 // pred_region
          %s684 = sand.u32 %s116, 1
          %s685 = scalar_lea.sflag [#allocation3], %s684
          %s686 = sand.u32 %s116, 1
          %s687 = smul.addr %s686, 64
          %s688 = scalar_lea.vmem [#allocation2], %s687
          %689 = dma.done %s685, 1024
        $region48: #{tpu_custom_call.1} parent=43 // pred_fallthru
          _
      $region44: #{tpu_custom_call.1} parent=5 // pred_fallthru
        _
    $region6: #{tpu_custom_call.1} parent=1 // loop_footer
      %s17 = sadd.s32 1, %s13
    $region7: #{tpu_custom_call.1} parent=1 // loop_footer_branch
      %12 = sbr.rel target = $region3
    $region8: #{tpu_custom_call.1} parent=1 // loop_exit
      _
    %690 = vsyncpa [#allocation3], 1
    %s691 = scalar_lea.sflag [#allocation3], 1
    %692 = vsyncpa %s691, 1

</llo_original>
